<compile_context>
chip_gen: v6e
topology: v6e:2x2x1
jax: 0.10.0
libtpu: 0.0.40
codegen_flags: <defaults>
</compile_context>

<pallas_src>
import functools

import jax
import jax.numpy as jnp
from jax.experimental import pallas as pl
from jax.experimental.pallas import tpu as pltpu


def _pick_tile(n, max_tile, align):
    """Largest multiple of `align` that divides n and is <= max_tile; else n."""
    best = None
    t = align
    limit = min(n, max_tile)
    while t <= limit:
        if n % t == 0:
            best = t
        t += align
    return best if best is not None else n


# ---------------------------------------------------------------------------
# Pass 1: global average pool over hw + fused excitation matmuls.
# ---------------------------------------------------------------------------
def _pool_excite_kernel(x_ref, wb_ref, wf_ref, scale_ref, acc_ref, *, inv_hw):
    j = pl.program_id(1)

    @pl.when(j == 0)
    def _init():
        acc_ref[...] = jnp.zeros_like(acc_ref)

    # (1, c, t_hw) tile -> partial sum along the lane (hw) axis, f32 accumulate.
    acc_ref[...] += jnp.sum(x_ref[...].astype(jnp.float32), axis=-1)

    @pl.when(j == pl.num_programs(1) - 1)
    def _finalize():
        y = acc_ref[...] * inv_hw                               # (1, c) mean
        # Four branch Linear(no bias)+ReLU fused into one matmul.
        z = jnp.maximum(
            jnp.dot(y, wb_ref[...].astype(jnp.float32),
                    preferred_element_type=jnp.float32), 0.0)   # (1, 4*cr)
        # fc(concat([y1..y4])) + sigmoid.
        s = jax.nn.sigmoid(
            jnp.dot(z, wf_ref[...].astype(jnp.float32),
                    preferred_element_type=jnp.float32))        # (1, c)
        scale_ref[0] = s                                        # (1, 1, c) block


# ---------------------------------------------------------------------------
# Pass 2: lane-dense elementwise rescale, x * scale, tiled over (b*c, h*w).
# ---------------------------------------------------------------------------
def _apply_scale_kernel(x_ref, s_ref, o_ref):
    o_ref[...] = x_ref[...] * s_ref[...].astype(x_ref.dtype)


def se_layer_v2(x, w1, w2, w3, w4, wf):
    """SELayerV2 forward.

    x       : (b, c, h, w)
    w1..w4  : (c, c//reduction)       -- PyTorch fc{1..4}[0].weight transposed
    wf      : (4*c//reduction, c)     -- PyTorch fc[0].weight transposed
    """
    b, c, h, w = x.shape
    hw = h * w
    bc = b * c
    itemsize = jnp.dtype(x.dtype).itemsize

    # Fuse the four branch linears into a single (c, 4*cr) operand.
    wb = jnp.concatenate([w1, w2, w3, w4], axis=1)

    # ---- pass 1: pooled mean + excitation -> per-(b, c) gate ---------------
    budget = 4 * 1024 * 1024  # bytes per pipelined input buffer
    max_lanes = max(128, min(2048, (budget // max(1, c * itemsize)) // 128 * 128))
    t_hw1 = _pick_tile(hw, max_lanes, 128)
    n_hw1 = hw // t_hw1

    x3 = x.reshape(b, c, hw)
    scale3 = pl.pallas_call(
        functools.partial(_pool_excite_kernel, inv_hw=1.0 / hw),
        out_shape=jax.ShapeDtypeStruct((b, 1, c), jnp.float32),
        grid=(b, n_hw1),
        in_specs=[
            pl.BlockSpec((1, c, t_hw1), lambda i, j: (i, 0, j)),
            pl.BlockSpec(wb.shape, lambda i, j: (0, 0)),
            pl.BlockSpec(wf.shape, lambda i, j: (0, 0)),
        ],
        out_specs=pl.BlockSpec((1, 1, c), lambda i, j: (i, 0, 0)),
        scratch_shapes=[pltpu.VMEM((1, c), jnp.float32)],
        compiler_params=pltpu.CompilerParams(
            dimension_semantics=("parallel", "arbitrary"),
            vmem_limit_bytes=32 * 1024 * 1024),
    )(x3, wb, wf)

    # ---- pass 2: x * scale, streamed over (b*c, h*w) lane-dense tiles ------
    t_hw2 = _pick_tile(hw, 2048, 128)
    max_rows = max(8, min(512, (2 * 1024 * 1024 // max(1, t_hw2 * itemsize)) // 8 * 8))
    t_bc = _pick_tile(bc, max_rows, 8)

    x2 = x.reshape(bc, hw)
    scale_col = scale3.reshape(bc, 1)

    out = pl.pallas_call(
        _apply_scale_kernel,
        out_shape=jax.ShapeDtypeStruct((bc, hw), x.dtype),
        grid=(bc // t_bc, hw // t_hw2),
        in_specs=[
            pl.BlockSpec((t_bc, t_hw2), lambda i, j: (i, j)),
            pl.BlockSpec((t_bc, 1), lambda i, j: (i, 0)),
        ],
        out_specs=pl.BlockSpec((t_bc, t_hw2), lambda i, j: (i, j)),
        compiler_params=pltpu.CompilerParams(
            dimension_semantics=("parallel", "parallel"),
            vmem_limit_bytes=32 * 1024 * 1024),
    )(x2, scale_col)

    return out.reshape(b, c, h, w)


if __name__ == "__main__":
    key = jax.random.PRNGKey(0)
    b, c, h, w = 2, 4, 16, 16
    reduction = 1
    cr = c // reduction
    cardinality = 4

    k = jax.random.split(key, 6)
    x = jax.random.normal(k[0], (b, c, h, w), dtype=jnp.float32)

    # Deterministic init mimicking nn.Linear default: U(-1/sqrt(in), 1/sqrt(in)).
    # Weights are stored already transposed to (in_features, out_features).
    bound_branch = 1.0 / (c ** 0.5)
    w1 = jax.random.uniform(k[1], (c, cr), jnp.float32, -bound_branch, bound_branch)
    w2 = jax.random.uniform(k[2], (c, cr), jnp.float32, -bound_branch, bound_branch)
    w3 = jax.random.uniform(k[3], (c, cr), jnp.float32, -bound_branch, bound_branch)
    w4 = jax.random.uniform(k[4], (c, cr), jnp.float32, -bound_branch, bound_branch)
    bound_fc = 1.0 / ((cr * cardinality) ** 0.5)
    wf = jax.random.uniform(k[5], (cr * cardinality, c), jnp.float32, -bound_fc, bound_fc)

    out = jax.jit(se_layer_v2)(x, w1, w2, w3, w4, wf)
    jax.block_until_ready(out)

    # Pure-JAX reference for a correctness check.
    y = x.mean(axis=(2, 3))                             # (b, c)
    y1 = jnp.maximum(y @ w1, 0.0)
    y2 = jnp.maximum(y @ w2, 0.0)
    y3 = jnp.maximum(y @ w3, 0.0)
    y4 = jnp.maximum(y @ w4, 0.0)
    y_cat = jnp.concatenate([y1, y2, y3, y4], axis=1)   # (b, 4*cr)
    scale = jax.nn.sigmoid(y_cat @ wf)                  # (b, c)
    ref = x * scale[:, :, None, None]

    assert out.shape == x.shape and out.dtype == x.dtype
    assert jnp.allclose(out, ref, atol=1e-5, rtol=1e-5), "mismatch vs reference"
    print("KERNEL_OK")
</pallas_src>

<mosaic_0001>
module attributes {stable_mosaic.version = 11 : i64} {
  func.func @_pool_excite_kernel(%arg0: i32, %arg1: i32, %arg2: memref<1x4x256xf32, #tpu.memory_space<vmem>>, %arg3: memref<4x16xf32, #tpu.memory_space<vmem>>, %arg4: memref<16x4xf32, #tpu.memory_space<vmem>>, %arg5: memref<1x1x4xf32, #tpu.memory_space<vmem>>, %arg6: memref<1x4xf32, #tpu.memory_space<vmem>>) attributes {dimension_semantics = [#tpu.dimension_semantics<parallel>, #tpu.dimension_semantics<arbitrary>], iteration_bounds = array<i64: 2, 1>, scalar_prefetch = 0 : i64, scratch_operands = 1 : i64, tpu.core_type = #tpu.core_type<tc>, window_params = [{transform_indices = @transform_0, window_bounds = array<i64: 1, 4, 256>}, {pipeline_mode = #tpu.pipeline_mode<synchronous>, transform_indices = @transform_1, window_bounds = array<i64: 4, 16>}, {pipeline_mode = #tpu.pipeline_mode<synchronous>, transform_indices = @transform_2, window_bounds = array<i64: 16, 4>}, {transform_indices = @transform_3, window_bounds = array<i64: 1, 1, 4>}]} {
    %c0_i32 = arith.constant 0 : i32
    %0 = arith.cmpi eq, %arg1, %c0_i32 : i32
    %1 = arith.extui %0 : i1 to i32
    %c0_i32_0 = arith.constant 0 : i32
    %2 = arith.cmpi ne, %1, %c0_i32_0 : i32
    scf.if %2 {
      %cst_9 = arith.constant 0.000000e+00 : f32
      %11 = vector.broadcast %cst_9 : f32 to vector<1x4xf32>
      %c0_10 = arith.constant 0 : index
      %c0_11 = arith.constant 0 : index
      %12 = vector.load %arg6[%c0_10, %c0_11] : memref<1x4xf32, #tpu.memory_space<vmem>>, vector<1x4xf32>
      tpu.vector_store %arg6[%c0_10, %c0_11], %11 {strides = array<i32>} : memref<1x4xf32, #tpu.memory_space<vmem>>, vector<1x4xf32>,
    } else {
    }
    %c0 = arith.constant 0 : index
    %c0_1 = arith.constant 0 : index
    %3 = vector.load %arg6[%c0, %c0_1] : memref<1x4xf32, #tpu.memory_space<vmem>>, vector<1x4xf32>
    %c0_2 = arith.constant 0 : index
    %c0_3 = arith.constant 0 : index
    %c0_4 = arith.constant 0 : index
    %4 = vector.load %arg2[%c0_2, %c0_3, %c0_4] : memref<1x4x256xf32, #tpu.memory_space<vmem>>, vector<1x4x256xf32>
    %cst = arith.constant dense<0.000000e+00> : vector<1x4xf32>
    %5 = vector.multi_reduction <add>, %4, %cst [2] : vector<1x4x256xf32> to vector<1x4xf32>
    %6 = arith.addf %3, %5 : vector<1x4xf32>
    %c0_5 = arith.constant 0 : index
    %c0_6 = arith.constant 0 : index
    %7 = vector.load %arg6[%c0_5, %c0_6] : memref<1x4xf32, #tpu.memory_space<vmem>>, vector<1x4xf32>
    tpu.vector_store %arg6[%c0_5, %c0_6], %6 {strides = array<i32>} : memref<1x4xf32, #tpu.memory_space<vmem>>, vector<1x4xf32>,
    %c0_i32_7 = arith.constant 0 : i32
    %8 = arith.cmpi eq, %arg1, %c0_i32_7 : i32
    %9 = arith.extui %8 : i1 to i32
    %c0_i32_8 = arith.constant 0 : i32
    %10 = arith.cmpi ne, %9, %c0_i32_8 : i32
    scf.if %10 {
      %c0_9 = arith.constant 0 : index
      %c0_10 = arith.constant 0 : index
      %11 = vector.load %arg6[%c0_9, %c0_10] : memref<1x4xf32, #tpu.memory_space<vmem>>, vector<1x4xf32>
      %cst_11 = arith.constant 3.906250e-03 : f32
      %12 = vector.broadcast %cst_11 : f32 to vector<1x4xf32>
      %13 = arith.mulf %11, %12 : vector<1x4xf32>
      %c0_12 = arith.constant 0 : index
      %c0_13 = arith.constant 0 : index
      %14 = vector.load %arg3[%c0_12, %c0_13] : memref<4x16xf32, #tpu.memory_space<vmem>>, vector<4x16xf32>
      %cst_14 = arith.constant dense<0.000000e+00> : vector<1x16xf32>
      %15 = tpu.matmul %13, %14, %cst_14 {dimension_numbers = #tpu.dot_dimension_numbers<[1], [0], [0], [1], [0, 0, 1, 1], [], []>} : vector<1x4xf32>, vector<4x16xf32>, vector<1x16xf32> -> vector<1x16xf32>
      %cst_15 = arith.constant 0.000000e+00 : f32
      %16 = vector.broadcast %cst_15 : f32 to vector<1x16xf32>
      %17 = arith.maximumf %15, %16 : vector<1x16xf32>
      %c0_16 = arith.constant 0 : index
      %c0_17 = arith.constant 0 : index
      %18 = vector.load %arg4[%c0_16, %c0_17] : memref<16x4xf32, #tpu.memory_space<vmem>>, vector<16x4xf32>
      %cst_18 = arith.constant dense<0.000000e+00> : vector<1x4xf32>
      %19 = tpu.matmul %17, %18, %cst_18 {dimension_numbers = #tpu.dot_dimension_numbers<[1], [0], [0], [1], [0, 0, 1, 1], [], []>} : vector<1x16xf32>, vector<16x4xf32>, vector<1x4xf32> -> vector<1x4xf32>
      %20 = arith.negf %19 : vector<1x4xf32>
      %21 = math.exp %20 : vector<1x4xf32>
      %cst_19 = arith.constant 1.000000e+00 : f32
      %22 = vector.broadcast %cst_19 : f32 to vector<1x4xf32>
      %23 = arith.addf %22, %21 : vector<1x4xf32>
      %24 = arith.divf %22, %23 : vector<1x4xf32>
      %c0_20 = arith.constant 0 : index
      %c0_21 = arith.constant 0 : index
      %c0_22 = arith.constant 0 : index
      %25 = vector.load %arg5[%c0_20, %c0_21, %c0_22] : memref<1x1x4xf32, #tpu.memory_space<vmem>>, vector<1x1x4xf32>
      %26 = vector.shape_cast %25 : vector<1x1x4xf32> to vector<1x4xf32>
      %27 = vector.shape_cast %24 : vector<1x4xf32> to vector<1x1x4xf32>
      tpu.vector_store %arg5[%c0_20, %c0_21, %c0_22], %27 {strides = array<i32>} : memref<1x1x4xf32, #tpu.memory_space<vmem>>, vector<1x1x4xf32>,
    } else {
    }
    return
  }
  func.func @transform_0(%arg0: i32, %arg1: i32) -> (i32, i32, i32) {
    %c0_i32 = arith.constant 0 : i32
    %c0_i32_0 = arith.constant 0 : i32
    return %arg0, %c0_i32, %arg1 : i32, i32, i32
  }
  func.func @transform_1(%arg0: i32, %arg1: i32) -> (i32, i32) {
    %c0_i32 = arith.constant 0 : i32
    %c0_i32_0 = arith.constant 0 : i32
    %c0_i32_1 = arith.constant 0 : i32
    return %c0_i32, %c0_i32_0 : i32, i32
  }
  func.func @transform_2(%arg0: i32, %arg1: i32) -> (i32, i32) {
    %c0_i32 = arith.constant 0 : i32
    %c0_i32_0 = arith.constant 0 : i32
    %c0_i32_1 = arith.constant 0 : i32
    return %c0_i32, %c0_i32_0 : i32, i32
  }
  func.func @transform_3(%arg0: i32, %arg1: i32) -> (i32, i32, i32) {
    %c0_i32 = arith.constant 0 : i32
    %c0_i32_0 = arith.constant 0 : i32
    %c0_i32_1 = arith.constant 0 : i32
    return %arg0, %c0_i32, %c0_i32_0 : i32, i32, i32
  }
}

module attributes {stable_mosaic.version = 11 : i64} {
  func.func @_apply_scale_kernel(%arg0: i32, %arg1: i32, %arg2: memref<8x256xf32, #tpu.memory_space<vmem>>, %arg3: memref<8x1xf32, #tpu.memory_space<vmem>>, %arg4: memref<8x256xf32, #tpu.memory_space<vmem>>) attributes {dimension_semantics = [#tpu.dimension_semantics<parallel>, #tpu.dimension_semantics<parallel>], iteration_bounds = array<i64: 1, 1>, scalar_prefetch = 0 : i64, scratch_operands = 0 : i64, tpu.core_type = #tpu.core_type<tc>, window_params = [{transform_indices = @transform_0, window_bounds = array<i64: 8, 256>}, {transform_indices = @transform_1, window_bounds = array<i64: 8, 1>}, {transform_indices = @transform_2, window_bounds = array<i64: 8, 256>}]} {
    %c0 = arith.constant 0 : index
    %c0_0 = arith.constant 0 : index
    %0 = vector.load %arg2[%c0, %c0_0] : memref<8x256xf32, #tpu.memory_space<vmem>>, vector<8x256xf32>
    %c0_1 = arith.constant 0 : index
    %c0_2 = arith.constant 0 : index
    %1 = vector.load %arg3[%c0_1, %c0_2] : memref<8x1xf32, #tpu.memory_space<vmem>>, vector<8x1xf32>
    %2 = vector.broadcast %1 : vector<8x1xf32> to vector<8x256xf32>
    %3 = arith.mulf %0, %2 : vector<8x256xf32>
    %c0_3 = arith.constant 0 : index
    %c0_4 = arith.constant 0 : index
    %4 = vector.load %arg4[%c0_3, %c0_4] : memref<8x256xf32, #tpu.memory_space<vmem>>, vector<8x256xf32>
    tpu.vector_store %arg4[%c0_3, %c0_4], %3 {strides = array<i32>} : memref<8x256xf32, #tpu.memory_space<vmem>>, vector<8x256xf32>,
    return
  }
  func.func @transform_0(%arg0: i32, %arg1: i32) -> (i32, i32) {
    %c0_i32 = arith.constant 0 : i32
    return %arg0, %arg1 : i32, i32
  }
  func.func @transform_1(%arg0: i32, %arg1: i32) -> (i32, i32) {
    %c0_i32 = arith.constant 0 : i32
    %c0_i32_0 = arith.constant 0 : i32
    return %arg0, %c0_i32 : i32, i32
  }
  func.func @transform_2(%arg0: i32, %arg1: i32) -> (i32, i32) {
    %c0_i32 = arith.constant 0 : i32
    return %arg0, %arg1 : i32, i32
  }
}

</mosaic_0001>

<llo_original>
// kernel: se_layer_v2.3
$region0: #{se_layer_v2.3}
  #allocation0 [shape = 'u32[]', space=smem, size = 0x4, offset = 0x4, fixed_abs, tag = 'smem constant byte address 0x4 - core index']
  #allocation1 [shape = 'u32[144,128]{1,0:T(1,128)}', space=vmem, size = 0x12000, scoped, tag = 'internal scratch']
  %s0 = inlined_call_operand.vmem [shape: f32[8,256], index: 0, kind: input, shape index: {}]
  %s1 = inlined_call_operand.vmem [shape: f32[8,1], index: 1, kind: input, shape index: {}]
  %s2 = inlined_call_operand.vmem [shape: f32[8,256], index: 2, kind: output, shape index: {}]
  %s3 = sld [smem:[#allocation0]]
  $region18: #{se_layer_v2.3} parent=0
    _
  %s5 = ssub.s32 1, %s3
  %s6 = scalar_select 0, %s5, %s3
  // Predicated region
  $region2: #{se_layer_v2.3} parent=0 // pred_check
    _
  $region3: #{se_layer_v2.3} parent=0 // pred_check_branch
    %8 = sbr.rel (0) target = $region5
  $region4: #{se_layer_v2.3} parent=0 // pred_region
    _
  $region5: #{se_layer_v2.3} parent=0 // pred_fallthru
    _
  // Predicated region
  $region6: #{se_layer_v2.3} parent=0 // pred_check
    _
  $region7: #{se_layer_v2.3} parent=0 // pred_check_branch
    %10 = sbr.rel (0) target = $region9
  $region8: #{se_layer_v2.3} parent=0 // pred_region
    _
  $region9: #{se_layer_v2.3} parent=0 // pred_fallthru
    _
  %v11 = vld [vmem:[%s0] sm:$0xff]
  %v12 = vld [vmem:[%s0 + $0x8] sm:$0xff]
  %v13 = vld [vmem:[%s1] sm:$0xff]
  %15 = vset.pattern.permute.xlu0 0
  %16 = vperm.xlu0 %15, %v13
  %v17 = vpop.permute.xlu0 %16
  %v19 = vmul.f32 %v11, %v17
  %v20 = vmul.f32 %v12, %v17
  %21 = vst [vmem:[%s2] sm:$0xff] %v19
  %22 = vst [vmem:[%s2 + $0x8] sm:$0xff] %v20
  // Predicated region
  $region10: #{se_layer_v2.3} parent=0 // pred_check
    _
  $region11: #{se_layer_v2.3} parent=0 // pred_check_branch
    %24 = sbr.rel (0) target = $region13
  $region12: #{se_layer_v2.3} parent=0 // pred_region
    _
  $region13: #{se_layer_v2.3} parent=0 // pred_fallthru
    _
  // Predicated region
  $region14: #{se_layer_v2.3} parent=0 // pred_check
    _
  $region15: #{se_layer_v2.3} parent=0 // pred_check_branch
    %26 = sbr.rel (0) target = $region17
  $region16: #{se_layer_v2.3} parent=0 // pred_region
    _
  $region17: #{se_layer_v2.3} parent=0 // pred_fallthru
    _

// kernel: se_layer_v2.2
$region0: #{se_layer_v2.2}
  #allocation0 [shape = 'u32[]', space=smem, size = 0x4, offset = 0x4, fixed_abs, tag = 'smem constant byte address 0x4 - core index']
  #allocation1 [shape = 'u32[144,128]{1,0:T(1,128)}', space=vmem, size = 0x12000, scoped, tag = 'internal scratch']
  #allocation2 [shape = 'f32[1,4]{1,0:T(1,128)}', space=vmem, size = 0x200, scoped, tag = 'scratch operand']
  %s0 = inlined_call_operand.vmem [shape: f32[2,4,256], index: 0, kind: input, shape index: {}]
  %s1 = inlined_call_operand.vmem [shape: f32[4,16], index: 1, kind: input, shape index: {}]
  %s2 = inlined_call_operand.vmem [shape: f32[16,4], index: 2, kind: input, shape index: {}]
  %s3 = inlined_call_operand.vmem [shape: f32[2,1,4], index: 3, kind: output, shape index: {}]
  %s4 = sld [smem:[#allocation0]]
  $region53: #{se_layer_v2.2} parent=0
    _
  %s6 = ssub.s32 1, %s4
  %s7 = scalar_select 0, %s6, %s4
  loop: start=0, step=1, limit=4
  $region2: #{se_layer_v2.2} parent=0 // loop_pre_header
    _
  $region3: #{se_layer_v2.2} parent=0 // loop_header
    %s9 = sphi 0, %s13
    %p10 = scmp.ge.s32.totalorder %s9, 4
    %s16 = sphi 0, %s28
    %s17 = sphi 0, %s24
    %s18 = sphi 0, %s16
    %s19 = sphi 0, %s17
    %s20 = sphi 0, %s18
    %s21 = sphi 0, %s19
    %s33 = sphi 0, %s35
    %s36 = sphi 0, %s33
    %s37 = sphi 0, %s36
    %s53 = sphi 0, %s37
    %s57 = sphi 0, %s57
    %s59 = sphi 0, %s57
    %s60 = sphi 0, %s59
    %s74 = sphi 0, %s60
    %s78 = sphi 0, %s78
    %s80 = sphi 0, %s78
    %s81 = sphi 0, %s80
    %s95 = sphi 0, %s81
    %s101 = sphi 0, %s103
    %s104 = sphi 0, %s101
    %s105 = sphi 0, %s104
    %s121 = sphi 0, %s105
  $region4: #{se_layer_v2.2} parent=0 // loop_header_branch
    %12 = sbr.rel (%p10) target = $region8
  $region5: #{se_layer_v2.2} parent=0 // loop_body
    %s14 = ssub.s32 %s9, 1
    %s15 = ssub.s32 %s9, 2
    %s22 = sadd.s32 1, %s17
    %p23 = scmp.ge.s32.totalorder %s22, 1
    %s24 = scalar_select %p23, 0, %s22
    %s25 = sadd.s32 1, %s16
    %s26 = scalar_select %p23, %s25, %s16
    %p27 = scmp.ge.s32.totalorder %s26, 2
    %s28 = scalar_select %p27, 0, %s26
    %s29 = ssub.s32 %s16, %s28
    %s30 = ssub.s32 %s17, %s24
    %s31 = sor.u32 %s29, %s30
    %p32 = scmp.eq.s32.totalorder %s31, 0
    %s34 = sadd.s32 %s33, 1
    %s35 = scalar_select %p32, %s33, %s34
    %p38 = pneg %p32
    %p39 = scmp.eq.s32.totalorder %s9, 1
    %p40 = por %p38, %p39
    %p41 = scmp.ne.s32.totalorder %s33, %s36
    %p42 = scmp.eq.s32.totalorder %s9, 0
    %p43 = por %p41, %p42
    %p44 = scmp.ne.s32.totalorder %s33, %s36
    %p45 = scmp.eq.s32.totalorder %s14, 1
    %p46 = por %p44, %p45
    %p47 = scmp.ne.s32.totalorder %s36, %s37
    %p48 = scmp.eq.s32.totalorder %s14, 0
    %p49 = por %p47, %p48
    %p50 = scmp.ne.s32.totalorder %s36, %s37
    %p51 = scmp.eq.s32.totalorder %s15, 1
    %p52 = por %p50, %p51
    %p54 = scmp.ne.s32.totalorder %s37, %s53
    %p55 = scmp.eq.s32.totalorder %s15, 0
    %p56 = por %p54, %p55
    %s58 = sadd.s32 %s57, 1
    %p61 = scmp.eq.s32.totalorder %s9, 1
    %p62 = scmp.ne.s32.totalorder %s57, %s59
    %p63 = scmp.eq.s32.totalorder %s9, 0
    %p64 = por %p62, %p63
    %p65 = scmp.ne.s32.totalorder %s57, %s59
    %p66 = scmp.eq.s32.totalorder %s14, 1
    %p67 = por %p65, %p66
    %p68 = scmp.ne.s32.totalorder %s59, %s60
    %p69 = scmp.eq.s32.totalorder %s14, 0
    %p70 = por %p68, %p69
    %p71 = scmp.ne.s32.totalorder %s59, %s60
    %p72 = scmp.eq.s32.totalorder %s15, 1
    %p73 = por %p71, %p72
    %p75 = scmp.ne.s32.totalorder %s60, %s74
    %p76 = scmp.eq.s32.totalorder %s15, 0
    %p77 = por %p75, %p76
    %s79 = sadd.s32 %s78, 1
    %p82 = scmp.eq.s32.totalorder %s9, 1
    %p83 = scmp.ne.s32.totalorder %s78, %s80
    %p84 = scmp.eq.s32.totalorder %s9, 0
    %p85 = por %p83, %p84
    %p86 = scmp.ne.s32.totalorder %s78, %s80
    %p87 = scmp.eq.s32.totalorder %s14, 1
    %p88 = por %p86, %p87
    %p89 = scmp.ne.s32.totalorder %s80, %s81
    %p90 = scmp.eq.s32.totalorder %s14, 0
    %p91 = por %p89, %p90
    %p92 = scmp.ne.s32.totalorder %s80, %s81
    %p93 = scmp.eq.s32.totalorder %s15, 1
    %p94 = por %p92, %p93
    %p96 = scmp.ne.s32.totalorder %s81, %s95
    %p97 = scmp.eq.s32.totalorder %s15, 0
    %p98 = por %p96, %p97
    %s99 = ssub.s32 %s16, %s28
    %p100 = scmp.eq.s32.totalorder %s99, 0
    %s102 = sadd.s32 %s101, 1
    %s103 = scalar_select %p100, %s101, %s102
    %p106 = pneg %p100
    %p107 = scmp.eq.s32.totalorder %s9, 1
    %p108 = por %p106, %p107
    %p109 = scmp.ne.s32.totalorder %s101, %s104
    %p110 = scmp.eq.s32.totalorder %s9, 0
    %p111 = por %p109, %p110
    %p112 = scmp.ne.s32.totalorder %s101, %s104
    %p113 = scmp.eq.s32.totalorder %s14, 1
    %p114 = por %p112, %p113
    %p115 = scmp.ne.s32.totalorder %s104, %s105
    %p116 = scmp.eq.s32.totalorder %s14, 0
    %p117 = por %p115, %p116
    %p118 = scmp.ne.s32.totalorder %s104, %s105
    %p119 = scmp.eq.s32.totalorder %s15, 1
    %p120 = por %p118, %p119
    %p122 = scmp.ne.s32.totalorder %s105, %s121
    %p123 = scmp.eq.s32.totalorder %s15, 0
    %p124 = por %p122, %p123
    %p125 = scmp.le.s32.totalorder 1, %s9
    %p126 = scmp.lt.s32.totalorder %s9, 3
    %p127 = pnand %p125, %p126
    %p128 = pneg %p127
    // Predicated region
    $region9: #{se_layer_v2.2} parent=5 // pred_check
      _
    $region10: #{se_layer_v2.2} parent=5 // pred_check_branch
      %130 = sbr.rel (%p127) target = $region12
    $region11: #{se_layer_v2.2} parent=5 // pred_region
      %s131 = ssub.s32 %s9, 1
      // Predicated region
      $region13: #{se_layer_v2.2} parent=11 // pred_check
        %p132 = pneg %p70
      $region14: #{se_layer_v2.2} parent=11 // pred_check_branch
        %134 = sbr.rel (%p132) target = $region16
      $region15: #{se_layer_v2.2} parent=11 // pred_region
        _
      $region16: #{se_layer_v2.2} parent=11 // pred_fallthru
        _
      // Predicated region
      $region17: #{se_layer_v2.2} parent=11 // pred_check
        %p135 = pneg %p91
      $region18: #{se_layer_v2.2} parent=11 // pred_check_branch
        %137 = sbr.rel (%p135) target = $region20
      $region19: #{se_layer_v2.2} parent=11 // pred_region
        _
      $region20: #{se_layer_v2.2} parent=11 // pred_fallthru
        _
    $region12: #{se_layer_v2.2} parent=5 // pred_fallthru
      _
    %p138 = scmp.lt.s32.totalorder %s9, 2
    // Predicated region
    $region21: #{se_layer_v2.2} parent=5 // pred_check
      %p139 = pneg %p138
    $region22: #{se_layer_v2.2} parent=5 // pred_check_branch
      %141 = sbr.rel (%p139) target = $region24
    $region23: #{se_layer_v2.2} parent=5 // pred_region
      // Predicated region
      $region25: #{se_layer_v2.2} parent=23 // pred_check
        %p142 = pneg %p43
      $region26: #{se_layer_v2.2} parent=23 // pred_check_branch
        %144 = sbr.rel (%p142) target = $region28
      $region27: #{se_layer_v2.2} parent=23 // pred_region
        %s145 = smul.u32 2, %s17
        %p146 = scmp.lt.s32.totalorder %s16, 1
        %s147 = scalar_select %p146, %s16, 1
        %p148 = scmp.lt.s32.totalorder %s145, 1
        %s149 = scalar_select %p148, %s145, 1
        %s150 = smul.addr %s147, 2
        %s151 = sadd.s32 %s149, %s150
        %s152 = smul.addr %s151, 4
        %s153 = scalar_lea.vmem %s0, %s152
        %s154 = smul.u32 2, %s17
      $region28: #{se_layer_v2.2} parent=23 // pred_fallthru
        _
    $region24: #{se_layer_v2.2} parent=5 // pred_fallthru
      _
    %p155 = scmp.le.s32.totalorder 1, %s9
    %p156 = scmp.lt.s32.totalorder %s9, 3
    %p157 = pnand %p155, %p156
    %p158 = pneg %p157
    // Predicated region
    $region29: #{se_layer_v2.2} parent=5 // pred_check
      _
    $region30: #{se_layer_v2.2} parent=5 // pred_check_branch
      %160 = sbr.rel (%p157) target = $region32
    $region31: #{se_layer_v2.2} parent=5 // pred_region
      %s161 = ssub.s32 %s9, 1
      %s162 = smul.u32 2, %s19
      %p163 = scmp.lt.s32.totalorder %s18, 1
      %s164 = scalar_select %p163, %s18, 1
      %p165 = scmp.lt.s32.totalorder %s162, 1
      %s166 = scalar_select %p165, %s162, 1
      %s167 = smul.addr %s164, 2
      %s168 = sadd.s32 %s166, %s167
      %s169 = smul.addr %s168, 4
      %s170 = scalar_lea.vmem %s0, %s169
      %p171 = pneg %p49
      %p172 = pneg %p46
      %p173 = pneg %p70
      %p174 = pneg %p67
      %p175 = pneg %p91
      %p176 = pneg %p88
      %p177 = pneg %p117
      %p178 = pneg %p114
      %p179 = scmp.lt.s32.totalorder %s18, 1
      %s180 = scalar_select %p179, %s18, 1
      %s181 = scalar_lea.vmem %s3, %s180
      %s182 = smul.u32 2, %s19
      %p183 = scmp.lt.s32.totalorder %s18, 1
      %s184 = scalar_select %p183, %s18, 1
      %p185 = scmp.lt.s32.totalorder %s182, 1
      %s186 = scalar_select %p185, %s182, 1
      %s187 = smul.addr %s184, 2
      %s188 = sadd.s32 %s186, %s187
      %s189 = smul.addr %s188, 4
      %s190 = scalar_lea.vmem %s0, %s189
      %s191 = smul.u32 2, %s19
      %p192 = scmp.lt.s32.totalorder %s18, 1
      %s193 = scalar_select %p192, %s18, 1
      %s194 = scalar_lea.vmem %s3, %s193
      %p195 = scmp.eq.s32.totalorder %s19, 0
      // Predicated region
      $region33: #{se_layer_v2.2} parent=31 // pred_check
        %p196 = pneg %p195
      $region34: #{se_layer_v2.2} parent=31 // pred_check_branch
        %198 = sbr.rel (%p196) target = $region36
      $region35: #{se_layer_v2.2} parent=31 // pred_region
        %vm199 = vcmask 24576
        %200 = vst.msk [vmem:[#allocation2] sm:$0x1] %vm199, 0.0
      $region36: #{se_layer_v2.2} parent=31 // pred_fallthru
        _
      %v201 = vld [vmem:[#allocation2] sm:$0x1]
      %v202 = vld [vmem:[%s190] sm:$0xff]
      %v204 = vcombine.high %v202, %v202
      %vm206 = vcmask 1043456
      %v207 = vsel %vm206, %v202, 0.0
      %v208 = vsel %vm206, %v204, 0.0
      %v209 = vadd.f32 %v207, %v208
      %210 = vadd.xlane.f32.xlu0 %v209
      %v211 = vpop.xlane.xlu0 %210
      %v213 = vlaneseq
      %v214 = vshrl.u32 %v213, 7
      %v215 = vsub.s32 0, %v214
      %v216 = vrot.slane %v211, %v215
      %v217 = vlaneseq
      %v218 = vshrl.u32 %v217, 7
      %v219 = vsub.s32 1, %v218
      %v220 = vrot.slane %v211, %v219
      %v221 = vlaneseq
      %v222 = vshrl.u32 %v221, 7
      %v223 = vsub.s32 2, %v222
      %v224 = vrot.slane %v211, %v223
      %v225 = vlaneseq
      %v226 = vshrl.u32 %v225, 7
      %v227 = vsub.s32 3, %v226
      %v228 = vrot.slane %v211, %v227
      %v229 = vcombine.low %v216, %v220
      %v230 = vcombine.low %v224, %v228
      %v232 = vunpack.c.l.s4 1966171168
      %v233 = vunpack.c.0.s8 %v232
      %v234 = vlaneseq
      %v235 = vshrl.u32 %v234, 7
      %v236 = vsub.s32 %v233, %v235
      %v237 = vrot.slane %v229, %v236
      %v239 = vunpack.c.l.s4 1966171168
      %v240 = vunpack.c.0.s8 %v239
      %v241 = vlaneseq
      %v242 = vshrl.u32 %v241, 7
      %v243 = vsub.s32 %v240, %v242
      %v244 = vrot.slane %v230, %v243
      %v245 = vcombine.low %v237, %v244
      %v247 = vunpack.c.l.s4 1966171168
      %v248 = vunpack.c.0.s8 %v247
      %v249 = vlaneseq
      %v250 = vshrl.u32 %v249, 7
      %v251 = vsub.s32 %v248, %v250
      %v252 = vrot.slane %v245, %v251
      %253 = vset.pattern.permute.xlu0 0
      %254 = vperm.xlu0 %253, %v252
      %v255 = vpop.permute.xlu0 %254
      %v256 = vlaneseq
      %v257 = vand.u32 %v256, 127
      %v258 = vlaneseq
      %v259 = vshrl.u32 %v258, 7
      %v260 = vsub.s32 %v257, %v259
      %v261 = vrot.slane %v255, %v260
      %v263 = vunpack.c.l.s4 1966171168
      %v264 = vunpack.c.0.s8 %v263
      %v265 = vlaneseq
      %v266 = vshrl.u32 %v265, 7
      %v267 = vsub.s32 %v264, %v266
      %v268 = vrot.slane %v261, %v267
      %v270 = vunpack.c.l.s4 1966171168
      %v271 = vunpack.c.0.s8 %v270
      %v272 = vlaneseq
      %v273 = vshrl.u32 %v272, 7
      %v274 = vsub.s32 %v271, %v273
      %v275 = vrot.slane %v268, %v274
      %v277 = vadd.f32 %v201, %v275
      %vm278 = vcmask 24576
      %279 = vst.msk [vmem:[#allocation2] sm:$0x1] %vm278, %v277
      // Predicated region
      $region37: #{se_layer_v2.2} parent=31 // pred_check
        %p280 = pneg %p195
      $region38: #{se_layer_v2.2} parent=31 // pred_check_branch
        %282 = sbr.rel (%p280) target = $region40
      $region39: #{se_layer_v2.2} parent=31 // pred_region
        %v283 = vld [vmem:[#allocation2] sm:$0x1]
        %v284 = vmul.f32 %v283, 0.00390625
        %v285 = vld [vmem:[%s1] sm:$0xf]
        %vm286 = vcmask 31744
        %v288 = vsel %vm286, %v284, 0
        %v291 = vsel %vm206, %v285, 0
        %293 = vmatprep.subr.mxu0 0.0
        %294 = vmatpush1.msra.mxu0 0.0
        %295 = vmatprep.subr.mxu0 0.0
        %296 = vmatpush1.msra.mxu0 0.0
        %297 = vmatprep.subr.mxu0 0.0
        %298 = vmatpush1.msra.mxu0 0.0
        %299 = vmatprep.subr.mxu0 0.0
        %300 = vmatpush1.msra.mxu0 0.0
        %301 = vmatprep.subr.mxu0 0.0
        %302 = vmatpush1.msra.mxu0 0.0
        %303 = vmatprep.subr.mxu0 0.0
        %304 = vmatpush1.msra.mxu0 0.0
        %305 = vmatprep.subr.mxu0 0.0
        %306 = vmatpush1.msra.mxu0 0.0
        %307 = vmatprep.subr.mxu0 0.0
        %308 = vmatpush1.msra.mxu0 0.0
        %309 = vmatprep.subr.mxu0 0.0
        %310 = vmatpush1.msra.mxu0 0.0
        %311 = vmatprep.subr.mxu0 0.0
        %312 = vmatpush1.msra.mxu0 0.0
        %313 = vmatprep.subr.mxu0 0.0
        %314 = vmatpush1.msra.mxu0 0.0
        %315 = vmatprep.subr.mxu0 0.0
        %316 = vmatpush1.msra.mxu0 0.0
        %317 = vmatprep.subr.mxu0 0.0
        %318 = vmatpush1.msra.mxu0 0.0
        %319 = vmatprep.subr.mxu0 0.0
        %320 = vmatpush1.msra.mxu0 0.0
        %321 = vmatprep.subr.mxu0 0.0
        %322 = vmatpush1.msra.mxu0 0.0
        %323 = vmatprep.subr.mxu0 0.0
        %324 = vmatpush1.msra.mxu0 %v291
        %325 = vmatprep.subr.mxu0 0.0
        %326 = vmatpush2.msra.mxu0 0.0
        %327 = vmatprep.subr.mxu0 0.0
        %328 = vmatpush2.msra.mxu0 0.0
        %329 = vmatprep.subr.mxu0 0.0
        %330 = vmatpush2.msra.mxu0 0.0
        %331 = vmatprep.subr.mxu0 0.0
        %332 = vmatpush2.msra.mxu0 0.0
        %333 = vmatprep.subr.mxu0 0.0
        %334 = vmatpush2.msra.mxu0 0.0
        %335 = vmatprep.subr.mxu0 0.0
        %336 = vmatpush2.msra.mxu0 0.0
        %337 = vmatprep.subr.mxu0 0.0
        %338 = vmatpush2.msra.mxu0 0.0
        %339 = vmatprep.subr.mxu0 0.0
        %340 = vmatpush2.msra.mxu0 0.0
        %341 = vmatprep.subr.mxu0 0.0
        %342 = vmatpush2.msra.mxu0 0.0
        %343 = vmatprep.subr.mxu0 0.0
        %344 = vmatpush2.msra.mxu0 0.0
        %345 = vmatprep.subr.mxu0 0.0
        %346 = vmatpush2.msra.mxu0 0.0
        %347 = vmatprep.subr.mxu0 0.0
        %348 = vmatpush2.msra.mxu0 0.0
        %349 = vmatprep.subr.mxu0 0.0
        %350 = vmatpush2.msra.mxu0 0.0
        %351 = vmatprep.subr.mxu0 0.0
        %352 = vmatpush2.msra.mxu0 0.0
        %353 = vmatprep.subr.mxu0 0.0
        %354 = vmatpush2.msra.mxu0 0.0
        %355 = vmatprep.subr.mxu0 0.0
        %356 = vmatpush2.msra.mxu0 0.0
        %357 = vmatprep.mubr.f32.mxu0 0.0
        %358 = vmatmul.mubr.f32.gmra.mxu0 %v288
        %v359 = vpop.f32.mrf.mxu0
        %v360 = vadd.f32 0.0, %v359
        %v361 = vpop.f32.mrf.mxu0
        %362 = vdwg.mxu0
        %v363 = vmax.f32 %v360, 0.0
        %v364 = vld [vmem:[%s2] sm:$0xff]
        %v365 = vld [vmem:[%s2 + $0x8] sm:$0xff]
        %vm366 = vcmask 130048
        %v368 = vsel %vm366, %v363, 0
        %370 = vmatprep.subr.mxu0 0.0
        %371 = vmatpush1.msra.mxu0 0.0
        %372 = vmatprep.subr.mxu0 0.0
        %373 = vmatpush1.msra.mxu0 0.0
        %374 = vmatprep.subr.mxu0 0.0
        %375 = vmatpush1.msra.mxu0 0.0
        %376 = vmatprep.subr.mxu0 0.0
        %377 = vmatpush1.msra.mxu0 0.0
        %378 = vmatprep.subr.mxu0 0.0
        %379 = vmatpush1.msra.mxu0 0.0
        %380 = vmatprep.subr.mxu0 0.0
        %381 = vmatpush1.msra.mxu0 0.0
        %382 = vmatprep.subr.mxu0 0.0
        %383 = vmatpush1.msra.mxu0 0.0
        %384 = vmatprep.subr.mxu0 0.0
        %385 = vmatpush1.msra.mxu0 0.0
        %386 = vmatprep.subr.mxu0 0.0
        %387 = vmatpush1.msra.mxu0 0.0
        %388 = vmatprep.subr.mxu0 0.0
        %389 = vmatpush1.msra.mxu0 0.0
        %390 = vmatprep.subr.mxu0 0.0
        %391 = vmatpush1.msra.mxu0 0.0
        %392 = vmatprep.subr.mxu0 0.0
        %393 = vmatpush1.msra.mxu0 0.0
        %394 = vmatprep.subr.mxu0 0.0
        %395 = vmatpush1.msra.mxu0 0.0
        %396 = vmatprep.subr.mxu0 0.0
        %397 = vmatpush1.msra.mxu0 0.0
        %398 = vmatprep.subr.mxu0 0.0
        %399 = vmatpush1.msra.mxu0 %v365
        %400 = vmatprep.subr.mxu0 0.0
        %401 = vmatpush1.msra.mxu0 %v364
        %402 = vmatprep.subr.mxu0 0.0
        %403 = vmatpush2.msra.mxu0 0.0
        %404 = vmatprep.subr.mxu0 0.0
        %405 = vmatpush2.msra.mxu0 0.0
        %406 = vmatprep.subr.mxu0 0.0
        %407 = vmatpush2.msra.mxu0 0.0
        %408 = vmatprep.subr.mxu0 0.0
        %409 = vmatpush2.msra.mxu0 0.0
        %410 = vmatprep.subr.mxu0 0.0
        %411 = vmatpush2.msra.mxu0 0.0
        %412 = vmatprep.subr.mxu0 0.0
        %413 = vmatpush2.msra.mxu0 0.0
        %414 = vmatprep.subr.mxu0 0.0
        %415 = vmatpush2.msra.mxu0 0.0
        %416 = vmatprep.subr.mxu0 0.0
        %417 = vmatpush2.msra.mxu0 0.0
        %418 = vmatprep.subr.mxu0 0.0
        %419 = vmatpush2.msra.mxu0 0.0
        %420 = vmatprep.subr.mxu0 0.0
        %421 = vmatpush2.msra.mxu0 0.0
        %422 = vmatprep.subr.mxu0 0.0
        %423 = vmatpush2.msra.mxu0 0.0
        %424 = vmatprep.subr.mxu0 0.0
        %425 = vmatpush2.msra.mxu0 0.0
        %426 = vmatprep.subr.mxu0 0.0
        %427 = vmatpush2.msra.mxu0 0.0
        %428 = vmatprep.subr.mxu0 0.0
        %429 = vmatpush2.msra.mxu0 0.0
        %430 = vmatprep.subr.mxu0 0.0
        %431 = vmatpush2.msra.mxu0 0.0
        %432 = vmatprep.subr.mxu0 0.0
        %433 = vmatpush2.msra.mxu0 0.0
        %434 = vmatprep.mubr.f32.mxu0 0.0
        %435 = vmatmul.mubr.f32.gmra.mxu0 %v368
        %v436 = vpop.f32.mrf.mxu0
        %v437 = vadd.f32 0.0, %v436
        %v438 = vpop.f32.mrf.mxu0
        %439 = vdwg.mxu0
        %v440 = vxor.u32 %v437, 2147483648
        %v441 = vmul.f32 %v440, 1.442695
        %v442 = vpow.pop %v441
        %v443 = vadd.f32 %v442, 1.0
        %v444 = vrcp.pop %v443
        %v445 = vmul.f32 1.0, %v444
        %446 = vst.msk [vmem:[%s194] sm:$0x1] %vm278, %v445
      $region40: #{se_layer_v2.2} parent=31 // pred_fallthru
        _
      %p447 = scmp.lt.s32.totalorder %s18, 1
      %s448 = scalar_select %p447, %s18, 1
      %s449 = scalar_lea.vmem %s3, %s448
      // Predicated region
      $region41: #{se_layer_v2.2} parent=31 // pred_check
        %p450 = pneg %p114
      $region42: #{se_layer_v2.2} parent=31 // pred_check_branch
        %452 = sbr.rel (%p450) target = $region44
      $region43: #{se_layer_v2.2} parent=31 // pred_region
        _
      $region44: #{se_layer_v2.2} parent=31 // pred_fallthru
        _
    $region32: #{se_layer_v2.2} parent=5 // pred_fallthru
      _
    %p453 = scmp.le.s32.totalorder 2, %s9
    // Predicated region
    $region45: #{se_layer_v2.2} parent=5 // pred_check
      %p454 = pneg %p453
    $region46: #{se_layer_v2.2} parent=5 // pred_check_branch
      %456 = sbr.rel (%p454) target = $region48
    $region47: #{se_layer_v2.2} parent=5 // pred_region
      %s457 = ssub.s32 %s9, 2
      // Predicated region
      $region49: #{se_layer_v2.2} parent=47 // pred_check
        %p458 = pneg %p120
      $region50: #{se_layer_v2.2} parent=47 // pred_check_branch
        %460 = sbr.rel (%p458) target = $region52
      $region51: #{se_layer_v2.2} parent=47 // pred_region
        %p461 = scmp.lt.s32.totalorder %s20, 1
        %s462 = scalar_select %p461, %s20, 1
        %s463 = scalar_lea.vmem %s3, %s462
      $region52: #{se_layer_v2.2} parent=47 // pred_fallthru
        _
    $region48: #{se_layer_v2.2} parent=5 // pred_fallthru
      _
  $region6: #{se_layer_v2.2} parent=0 // loop_footer
    %s13 = sadd.s32 1, %s9
  $region7: #{se_layer_v2.2} parent=0 // loop_footer_branch
    %8 = sbr.rel target = $region3
  $region8: #{se_layer_v2.2} parent=0 // loop_exit
    _

</llo_original>
